<compile_context>
chip_gen: v7x
topology: tpu7x:2x2x1
jax: 0.10.0
libtpu: 0.0.40
codegen_flags: <defaults>
</compile_context>

<pallas_src>
import functools
import math

import jax
import jax.numpy as jnp
from jax.experimental import pallas as pl
from jax.experimental.pallas import tpu as pltpu


# ---------------------------------------------------------------------------
# Target-hardware detection (VMEM capacity, MXU width) with safe fallbacks.
# ---------------------------------------------------------------------------
@functools.lru_cache(maxsize=None)
def _tpu_target():
    vmem = None
    try:
        info = pltpu.get_tpu_info()
        vmem = int(getattr(info, "vmem_capacity_bytes", 0)) or None
    except Exception:
        vmem = None
    kind = ""
    try:
        kind = jax.devices()[0].device_kind.lower()
    except Exception:
        kind = ""
    mxu_n = 256 if any(t in kind for t in ("v6", "v7", "trillium", "ironwood")) else 128
    if vmem is None or vmem < (16 << 20):
        if any(t in kind for t in ("v4", "v5", "v6", "trillium")):
            vmem = 128 << 20
        else:
            vmem = 64 << 20          # conservative default (v7x-sized part)
    return int(vmem), int(mxu_n)


# ---------------------------------------------------------------------------
# Fused kernel: conv (accumulated MXU matmuls over unit-stride tap slabs)
#               + bias + optional InstanceNorm + optional LeakyReLU(0.2).
# One grid step = (one sample, one tile of output channels).
# ---------------------------------------------------------------------------
def _fused_conv_kernel(x_ref, w_ref, b_ref, mask_ref, o_ref, *,
                       taps, use_norm, use_act, n_valid, eps, slope):
    # x_ref : (1, R, Ck) [im2col / stride-1 kw-merged] or (1, 2, R, Ck) [stride-2], bf16
    # w_ref : (n_taps, Ck, TCout) bf16
    # b_ref : (1, TCout) f32
    # mask_ref : (M, 1) f32 (1 for valid spatial columns, 0 for junk columns)
    # o_ref : (1, M, TCout)
    m = o_ref.shape[1]

    def tap_slab(t):
        plane, start = taps[t]
        if plane is None:
            return x_ref[0, pl.ds(start, m), :]
        return x_ref[0, plane, pl.ds(start, m), :]

    # Initialise the accumulator from the first tap and fold the bias in
    # (saves a full (M, TCout) zero-fill + add pass per grid step).
    acc = jnp.dot(tap_slab(0), w_ref[0],
                  preferred_element_type=jnp.float32) + b_ref[...]
    for t in range(1, len(taps)):
        acc = acc + jnp.dot(tap_slab(t), w_ref[t],
                            preferred_element_type=jnp.float32)

    y = acc                                                 # (M, TCout) f32
    if use_norm:
        # InstanceNorm2d (affine=False, biased variance, eps=1e-5): per-(sample,
        # channel) stats over valid spatial positions.  Shifted two-pass (mean then
        # centred sum-of-squares) avoids the E[x^2]-mean^2 cancellation.
        mask = mask_ref[...]                                # (M, 1) f32
        inv_n = 1.0 / float(n_valid)
        mean = jnp.sum(y * mask, axis=0, keepdims=True) * inv_n
        d = (y - mean) * mask
        var = jnp.sum(d * d, axis=0, keepdims=True) * inv_n
        y = (y - mean) * jax.lax.rsqrt(var + eps)

    if use_act:
        y = jnp.where(y > 0, y, slope * y)                  # LeakyReLU(0.2)

    o_ref[0] = y.astype(o_ref.dtype)


# ---------------------------------------------------------------------------
# Wrapper-side helpers (plain JAX pads/reshapes; no big im2col except layer 0)
# ---------------------------------------------------------------------------
def _extract_patches(x, k, stride, pad):
    """Tiny im2col for layer 0 only: (N,H,W,C) -> (N, Ho*Wo, k*k*C), K order (kh,kw,c)."""
    xp = jnp.pad(x, ((0, 0), (pad, pad), (pad, pad), (0, 0)))
    n, hp, wp, c = xp.shape
    ho = (hp - k) // stride + 1
    wo = (wp - k) // stride + 1
    cols = []
    for kh in range(k):
        for kw in range(k):
            cols.append(xp[:, kh:kh + stride * ho:stride,
                           kw:kw + stride * wo:stride, :])
    patches = jnp.stack(cols, axis=3)                       # (N, Ho, Wo, k*k, C)
    return patches.reshape(n, ho * wo, k * k * c), ho, wo


def _block_spec(shape, index_map, single_buffer=False):
    if single_buffer:
        try:
            return pl.BlockSpec(shape, index_map, pipeline_mode=pl.Buffered(1))
        except Exception:
            pass
    return pl.BlockSpec(shape, index_map)


def _run_layer(x, layer, out_dtype):
    """x: (N, H, W, Cin_p) bf16 NHWC -> (N, Ho, Wo, Cout_p) out_dtype."""
    n, h, w_sz, cin = x.shape
    stride = layer["stride"]
    k, pad = 4, 1
    ho = (h + 2 * pad - k) // stride + 1
    wo = (w_sz + 2 * pad - k) // stride + 1
    w_taps = layer["w"]                                     # (T, Ck, Cout_p) bf16
    bias = layer["b"]                                       # (1, Cout_p) f32
    n_taps, ck, cout_p = w_taps.shape

    if layer["mode"] == "im2col":
        # Layer 0: Cin is tiny, so K = 16*Cin is the better MXU contraction.
        x_in, _, _ = _extract_patches(x, k, stride, pad)    # (N, Ho*Wo, 16*Cin) bf16
        period, m = wo, ho * wo
        taps = ((None, 0),)
    elif stride == 2:
        assert h % 2 == 0 and w_sz % 2 == 0
        hp, wp = h + 2, w_sz + 2
        hh, ww = hp // 2, wp // 2
        xp = jnp.pad(x, ((0, 0), (pad, pad), (pad, pad), (0, 0)))
        x5 = xp.reshape(n, hh, 2, ww, 2 * cin)              # merge W-parity into lanes
        xpl = jnp.transpose(x5, (0, 2, 1, 3, 4))            # (N, 2, Hh, Ww, 2Cin)
        x_in = xpl.reshape(n, 2, hh * ww, 2 * cin)
        x_in = jnp.pad(x_in, ((0, 0), (0, 0), (0, 8), (0, 0)))
        period, m = ww, ho * ww
        taps = tuple((kh % 2, (kh // 2) * ww + wpar)
                     for kh in range(4) for wpar in range(2))
    else:
        # Stride-1: merge kw into the contraction dim -> 4 taps with row-aligned
        # starts kh*wp_pad (wp_pad a multiple of 8) and K = 4*Cin.
        hp, wp = h + 2, w_sz + 2
        wp_pad = -(-wp // 8) * 8
        xp = jnp.pad(x, ((0, 0), (pad, pad),
                         (pad, pad + (wp_pad - wp) + 3), (0, 0)))
        slab = jnp.concatenate([xp[:, :, kw:kw + wp_pad, :] for kw in range(4)],
                               axis=-1)                     # (N, Hp, Wp_pad, 4*Cin)
        x_in = slab.reshape(n, hp * wp_pad, 4 * cin)
        period, m = wp_pad, ho * wp_pad
        taps = tuple((None, kh * wp_pad) for kh in range(4))

    # Valid-column mask over the flattened M axis (junk columns are excluded from
    # InstanceNorm stats and sliced off below).
    if period == wo:
        mask_arr = jnp.ones((m, 1), jnp.float32)
    else:
        col = jnp.arange(m, dtype=jnp.int32) % period
        mask_arr = (col < wo).astype(jnp.float32).reshape(m, 1)

    vmem_cap, mxu_n = _tpu_target()
    budget = max(32 << 20, int(vmem_cap * 0.82))            # headroom for Mosaic scratch
    out_itemsize = jnp.dtype(out_dtype).itemsize
    x_block = (1,) + x_in.shape[1:]
    x_bytes = math.prod(x_block) * x_in.dtype.itemsize

    # Cout tile: 256 on the 256-wide MXUs (v6e/v7x), 128 otherwise / on v5e.
    if mxu_n >= 256 and cout_p % 256 == 0:
        tcout = 256
    elif cout_p % 128 == 0 and cout_p > 128:
        tcout = 128
    else:
        tcout = cout_p

    single_resident = False
    while True:
        ct = cout_p // tcout
        # Grid ordering: keep the operand that is more expensive to re-fetch resident
        # across the inner axis (weights re-read (N-1)x under (n, ct); activations
        # re-read (ct-1)x under (ct, n)).
        w_total = w_taps.size * w_taps.dtype.itemsize
        x_total = x_in.size * x_in.dtype.itemsize
        weights_outer = ct > 1 and (n - 1) * w_total > (ct - 1) * x_total

        o_bytes = m * tcout * out_itemsize
        w_bytes = n_taps * ck * tcout * w_taps.dtype.itemsize
        acc_bytes = m * tcout * 4                           # single f32 accumulator
        slice_bytes = m * ck * x_in.dtype.itemsize          # per-tap slice temporaries
        x_bufs = 1 if (single_resident and not weights_outer) else 2
        w_bufs = 1 if (single_resident and weights_outer) else 2
        need = (x_bufs * x_bytes + w_bufs * w_bytes
                + 2 * (o_bytes + m * 4 + 4 * tcout)
                + 2 * acc_bytes + 2 * slice_bytes + (2 << 20))
        if need <= budget:
            break
        if tcout > 128 and cout_p % 128 == 0:
            tcout = 128                                     # shrink the Cout tile first
            continue
        if not single_resident:
            single_resident = True                          # single-buffer resident op
            continue
        # TODO(synk): for very large inputs additionally tile the flattened spatial
        # axis across the grid (two-pass InstanceNorm with per-channel sum/sum-sq
        # scratch) to bound the per-step VMEM block; at PatchGAN-typical resolutions
        # the per-sample blocks fit the per-generation budget.
        break

    vmem_limit = int(min(max(need, 32 << 20), budget))

    kernel = functools.partial(
        _fused_conv_kernel, taps=taps,
        use_norm=layer["use_norm"], use_act=layer["use_act"],
        n_valid=ho * wo, eps=1e-5, slope=0.2)

    nd = len(x_block)
    if weights_outer:
        grid = (ct, n)
        x_imap = lambda c_, b_, _nd=nd: (b_,) + (0,) * (_nd - 1)
        w_imap = lambda c_, b_: (0, 0, c_)
        b_imap = lambda c_, b_: (0, c_)
        m_imap = lambda c_, b_: (0, 0)
        o_imap = lambda c_, b_: (b_, 0, c_)
    else:
        grid = (n, ct)
        x_imap = lambda b_, c_, _nd=nd: (b_,) + (0,) * (_nd - 1)
        w_imap = lambda b_, c_: (0, 0, c_)
        b_imap = lambda b_, c_: (0, c_)
        m_imap = lambda b_, c_: (0, 0)
        o_imap = lambda b_, c_: (b_, 0, c_)

    x_spec = _block_spec(x_block, x_imap,
                         single_buffer=single_resident and not weights_outer)
    w_spec = _block_spec((n_taps, ck, tcout), w_imap,
                         single_buffer=single_resident and weights_outer)
    b_spec = pl.BlockSpec((1, tcout), b_imap)
    m_spec = pl.BlockSpec((m, 1), m_imap)
    o_spec = pl.BlockSpec((1, m, tcout), o_imap)

    flops = 2 * n * m * n_taps * ck * cout_p
    bytes_accessed = (x_in.size * x_in.dtype.itemsize
                      + w_taps.size * w_taps.dtype.itemsize
                      + bias.size * 4 + mask_arr.size * 4
                      + n * m * cout_p * out_itemsize)

    out = pl.pallas_call(
        kernel,
        out_shape=jax.ShapeDtypeStruct((n, m, cout_p), out_dtype),
        grid=grid,
        in_specs=[x_spec, w_spec, b_spec, m_spec],
        out_specs=o_spec,
        compiler_params=pltpu.CompilerParams(
            dimension_semantics=("parallel", "parallel"),
            vmem_limit_bytes=vmem_limit),
        cost_estimate=pl.CostEstimate(flops=flops, transcendentals=0,
                                      bytes_accessed=bytes_accessed),
    )(x_in, w_taps, bias, mask_arr)

    # TODO(synk): have this kernel emit the layout the NEXT layer consumes (parity-
    # split / kw-merged, pre-padded slab) via its out BlockSpec to eliminate the
    # wrapper-side pad/reshape/transpose HBM round trip between layers.
    out = out.reshape(n, ho, period, cout_p)
    if period != wo:
        out = out[:, :, :wo, :]                             # drop junk columns
    return out


# ---------------------------------------------------------------------------
# Parameters + forward
# ---------------------------------------------------------------------------
def make_discriminator_params(key, in_channels, base_num_features, n_layers=3,
                              pad_layer0_cout=None):
    """Deterministic synthetic weights (normal * 0.02), pre-packed per layer in the
    tap layout (bf16)."""
    ksz = 4
    cfgs = [dict(cin=in_channels, cout=base_num_features, stride=2,
                 use_norm=False, use_act=True, mode="im2col",
                 pad_cout=(pad_layer0_cout
                           if pad_layer0_cout and pad_layer0_cout > base_num_features
                           else None))]
    nf_mult = 1
    for i in range(1, n_layers):
        nf_prev, nf_mult = nf_mult, min(2 ** i, 8)
        cfgs.append(dict(cin=base_num_features * nf_prev,
                         cout=base_num_features * nf_mult, stride=2,
                         use_norm=True, use_act=True, mode="taps", pad_cout=None))
    nf_prev, nf_mult = nf_mult, min(2 ** n_layers, 8)
    cfgs.append(dict(cin=base_num_features * nf_prev,
                     cout=base_num_features * nf_mult, stride=1,
                     use_norm=True, use_act=True, mode="taps", pad_cout=None))
    # Final conv: pad Cout 1 -> 128 (lane-dense stores / real MXU N dim); the wrapper
    # slices channel 0 at the end.
    cfgs.append(dict(cin=base_num_features * nf_mult, cout=1, stride=1,
                     use_norm=False, use_act=False, mode="taps", pad_cout=128))

    layers = []
    prev_cout_p = None
    for idx, cfg in enumerate(cfgs):
        key, kw_key, kb_key = jax.random.split(key, 3)
        cin, cout = cfg["cin"], cfg["cout"]
        w = 0.02 * jax.random.normal(kw_key, (ksz, ksz, cin, cout), jnp.float32)
        b = 0.01 * jax.random.normal(kb_key, (cout,), jnp.float32)
        # Match the previous layer's (possibly padded) Cout on the input-channel axis;
        # padded weights are zero so the extra channels contribute nothing.
        cin_p = prev_cout_p if (idx > 0 and prev_cout_p and prev_cout_p > cin) else cin
        cout_p = cfg["pad_cout"] or cout
        if cin_p > cin:
            w = jnp.pad(w, ((0, 0), (0, 0), (0, cin_p - cin), (0, 0)))
        if cout_p > cout:
            w = jnp.pad(w, ((0, 0), (0, 0), (0, 0), (0, cout_p - cout)))
            b = jnp.pad(b, ((0, cout_p - cout),))
        if cfg["mode"] == "im2col":
            w_taps = w.reshape(1, ksz * ksz * cin_p, cout_p)      # K order (kh, kw, c)
        elif cfg["stride"] == 2:
            w_taps = w.reshape(2 * ksz, 2 * cin_p, cout_p)        # tap = (kh, kw//2)
        else:
            w_taps = w.reshape(ksz, ksz * cin_p, cout_p)          # tap = kh, K=(kw, c)
        layers.append(dict(mode=cfg["mode"], stride=cfg["stride"],
                           use_norm=cfg["use_norm"], use_act=cfg["use_act"],
                           cout=cout,
                           w=w_taps.astype(jnp.bfloat16),
                           b=b.reshape(1, cout_p).astype(jnp.float32)))
        prev_cout_p = cout_p
    return layers


def patchgan_discriminator_forward(x_nchw, layers):
    """x: (N, C, H, W) float32 -> (N, 1, Ho, Wo) float32."""
    # TODO(synk): intermediate activations are stored bf16 between layers (f32
    # accumulation inside each kernel); a PyTorch reference is f32 end-to-end,
    # so expect small, usually acceptable drift.
    x = jnp.transpose(x_nchw, (0, 2, 3, 1)).astype(jnp.bfloat16)   # NCHW -> NHWC, bf16
    for i, layer in enumerate(layers):
        is_last = i == len(layers) - 1
        x = _run_layer(x, layer, jnp.float32 if is_last else jnp.bfloat16)
    x = x[..., :layers[-1]["cout"]].astype(jnp.float32)            # drop padded channels
    return jnp.transpose(x, (0, 3, 1, 2))                          # NHWC -> NCHW


if __name__ == "__main__":
    key = jax.random.PRNGKey(0)
    k_in, k_par = jax.random.split(key)

    # Small but valid shape: the k4/s2 x3 + k4/s1 x2 chain needs >= 24 spatial.
    N, C, H, W = 2, 4, 32, 32
    ndf = 8
    x = jax.random.normal(k_in, (N, C, H, W), dtype=jnp.float32)

    _, mxu_n = _tpu_target()
    layers = make_discriminator_params(
        k_par, in_channels=C, base_num_features=ndf, n_layers=3,
        pad_layer0_cout=128 if mxu_n >= 256 else None)   # lane-dense L0 on v6e/v7x only

    out = patchgan_discriminator_forward(x, layers)
    out = jax.block_until_ready(out)

    assert out.shape == (N, 1, 2, 2), out.shape
    assert bool(jnp.all(jnp.isfinite(out)))
    print("KERNEL_OK")
</pallas_src>

<mosaic_0001>
module attributes {stable_mosaic.version = 11 : i64} {
  func.func @_fused_conv_kernel(%arg0: i32, %arg1: i32, %arg2: memref<1x256x64xbf16, #tpu.memory_space<vmem>>, %arg3: memref<1x64x8xbf16, #tpu.memory_space<vmem>>, %arg4: memref<1x8xf32, #tpu.memory_space<vmem>>, %arg5: memref<256x1xf32, #tpu.memory_space<vmem>>, %arg6: memref<1x256x8xbf16, #tpu.memory_space<vmem>>) attributes {dimension_semantics = [#tpu.dimension_semantics<parallel>, #tpu.dimension_semantics<parallel>], iteration_bounds = array<i64: 2, 1>, scalar_prefetch = 0 : i64, scratch_operands = 0 : i64, tpu.core_type = #tpu.core_type<tc>, window_params = [{transform_indices = @transform_0, window_bounds = array<i64: 1, 256, 64>}, {transform_indices = @transform_1, window_bounds = array<i64: 1, 64, 8>}, {transform_indices = @transform_2, window_bounds = array<i64: 1, 8>}, {pipeline_mode = #tpu.pipeline_mode<synchronous>, transform_indices = @transform_3, window_bounds = array<i64: 256, 1>}, {transform_indices = @transform_4, window_bounds = array<i64: 1, 256, 8>}]} {
    %c0 = arith.constant 0 : index
    %c0_0 = arith.constant 0 : index
    %c0_1 = arith.constant 0 : index
    %0 = vector.load %arg2[%c0, %c0_0, %c0_1] : memref<1x256x64xbf16, #tpu.memory_space<vmem>>, vector<1x256x64xbf16>
    %1 = vector.shape_cast %0 : vector<1x256x64xbf16> to vector<256x64xbf16>
    %c0_2 = arith.constant 0 : index
    %c0_3 = arith.constant 0 : index
    %c0_4 = arith.constant 0 : index
    %2 = vector.load %arg3[%c0_2, %c0_3, %c0_4] : memref<1x64x8xbf16, #tpu.memory_space<vmem>>, vector<1x64x8xbf16>
    %3 = vector.shape_cast %2 : vector<1x64x8xbf16> to vector<64x8xbf16>
    %cst = arith.constant dense<0.000000e+00> : vector<256x8xf32>
    %4 = tpu.matmul %1, %3, %cst {dimension_numbers = #tpu.dot_dimension_numbers<[1], [0], [0], [1], [0, 0, 1, 1], [], []>} : vector<256x64xbf16>, vector<64x8xbf16>, vector<256x8xf32> -> vector<256x8xf32>
    %c0_5 = arith.constant 0 : index
    %c0_6 = arith.constant 0 : index
    %5 = vector.load %arg4[%c0_5, %c0_6] : memref<1x8xf32, #tpu.memory_space<vmem>>, vector<1x8xf32>
    %6 = vector.broadcast %5 : vector<1x8xf32> to vector<256x8xf32>
    %7 = arith.addf %4, %6 : vector<256x8xf32>
    %cst_7 = arith.constant 0.000000e+00 : f32
    %8 = vector.broadcast %cst_7 : f32 to vector<256x8xf32>
    %9 = arith.cmpf ogt, %7, %8 : vector<256x8xf32>
    %cst_8 = arith.constant 2.000000e-01 : f32
    %10 = vector.broadcast %cst_8 : f32 to vector<256x8xf32>
    %11 = arith.mulf %10, %7 : vector<256x8xf32>
    %12 = arith.select %9, %7, %11 : vector<256x8xi1>, vector<256x8xf32>
    %13 = arith.truncf %12 : vector<256x8xf32> to vector<256x8xbf16>
    %c0_9 = arith.constant 0 : index
    %c0_10 = arith.constant 0 : index
    %c0_11 = arith.constant 0 : index
    %14 = vector.load %arg6[%c0_9, %c0_10, %c0_11] : memref<1x256x8xbf16, #tpu.memory_space<vmem>>, vector<1x256x8xbf16>
    %15 = vector.shape_cast %14 : vector<1x256x8xbf16> to vector<256x8xbf16>
    %16 = vector.shape_cast %13 : vector<256x8xbf16> to vector<1x256x8xbf16>
    tpu.vector_store %arg6[%c0_9, %c0_10, %c0_11], %16 {strides = array<i32>} : memref<1x256x8xbf16, #tpu.memory_space<vmem>>, vector<1x256x8xbf16>,
    return
  }
  func.func @transform_0(%arg0: i32, %arg1: i32) -> (i32, i32, i32) {
    %c0_i32 = arith.constant 0 : i32
    %c0_i32_0 = arith.constant 0 : i32
    %c0_i32_1 = arith.constant 0 : i32
    return %arg0, %c0_i32, %c0_i32_0 : i32, i32, i32
  }
  func.func @transform_1(%arg0: i32, %arg1: i32) -> (i32, i32, i32) {
    %c0_i32 = arith.constant 0 : i32
    %c0_i32_0 = arith.constant 0 : i32
    %c0_i32_1 = arith.constant 0 : i32
    return %c0_i32, %c0_i32_0, %arg1 : i32, i32, i32
  }
  func.func @transform_2(%arg0: i32, %arg1: i32) -> (i32, i32) {
    %c0_i32 = arith.constant 0 : i32
    %c0_i32_0 = arith.constant 0 : i32
    return %c0_i32, %arg1 : i32, i32
  }
  func.func @transform_3(%arg0: i32, %arg1: i32) -> (i32, i32) {
    %c0_i32 = arith.constant 0 : i32
    %c0_i32_0 = arith.constant 0 : i32
    %c0_i32_1 = arith.constant 0 : i32
    return %c0_i32, %c0_i32_0 : i32, i32
  }
  func.func @transform_4(%arg0: i32, %arg1: i32) -> (i32, i32, i32) {
    %c0_i32 = arith.constant 0 : i32
    %c0_i32_0 = arith.constant 0 : i32
    return %arg0, %c0_i32, %arg1 : i32, i32, i32
  }
}

</mosaic_0001>

<llo_original>
// kernel: tpu_custom_call.1
$region0: #{tpu_custom_call.1}
  #allocation0 [shape = 'u32[]', space=smem, size = 0x4, offset = 0x4, fixed_abs, tag = 'smem constant byte address 0x4 - core index']
  #allocation1 [shape = 'u32[144,128]{1,0:T(1,128)}', space=vmem, size = 0x12000, scoped, tag = 'internal scratch']
  %s0 = inlined_call_operand.vmem [shape: bf16[2,256,64], index: 0, kind: input, shape index: {}]
  %s1 = inlined_call_operand.vmem [shape: bf16[1,64,8], index: 1, kind: input, shape index: {}]
  %s2 = inlined_call_operand.vmem [shape: f32[1,8], index: 2, kind: input, shape index: {}]
  %s3 = inlined_call_operand.vmem [shape: f32[256,1], index: 3, kind: input, shape index: {}]
  %s4 = inlined_call_operand.vmem [shape: bf16[2,256,8], index: 4, kind: output, shape index: {}]
  %s5 = sld [smem:[#allocation0]]
  $region49: #{tpu_custom_call.1} parent=0
    _
  %s7 = ssub.s32 1, %s5
  %s8 = scalar_select 0, %s7, %s5
  loop: start=0, step=1, limit=4
  $region2: #{tpu_custom_call.1} parent=0 // loop_pre_header
    _
  $region3: #{tpu_custom_call.1} parent=0 // loop_header
    %s10 = sphi 0, %s14
    %p11 = scmp.ge.s32.totalorder %s10, 4
    %s17 = sphi 0, %s29
    %s18 = sphi 0, %s25
    %s19 = sphi 0, %s17
    %s20 = sphi 0, %s18
    %s21 = sphi 0, %s19
    %s22 = sphi 0, %s20
    %s32 = sphi 0, %s34
    %s35 = sphi 0, %s32
    %s36 = sphi 0, %s35
    %s52 = sphi 0, %s36
    %s58 = sphi 0, %s60
    %s61 = sphi 0, %s58
    %s62 = sphi 0, %s61
    %s78 = sphi 0, %s62
    %s84 = sphi 0, %s86
    %s87 = sphi 0, %s84
    %s88 = sphi 0, %s87
    %s104 = sphi 0, %s88
    %s108 = sphi 0, %s108
    %s110 = sphi 0, %s108
    %s111 = sphi 0, %s110
    %s125 = sphi 0, %s111
    %s133 = sphi 0, %s135
    %s136 = sphi 0, %s133
    %s137 = sphi 0, %s136
    %s153 = sphi 0, %s137
  $region4: #{tpu_custom_call.1} parent=0 // loop_header_branch
    %13 = sbr.rel (%p11) target = $region8
  $region5: #{tpu_custom_call.1} parent=0 // loop_body
    %s15 = ssub.s32 %s10, 1
    %s16 = ssub.s32 %s10, 2
    %s23 = sadd.s32 1, %s18
    %p24 = scmp.ge.s32.totalorder %s23, 1
    %s25 = scalar_select %p24, 0, %s23
    %s26 = sadd.s32 1, %s17
    %s27 = scalar_select %p24, %s26, %s17
    %p28 = scmp.ge.s32.totalorder %s27, 2
    %s29 = scalar_select %p28, 0, %s27
    %s30 = ssub.s32 %s17, %s29
    %p31 = scmp.eq.s32.totalorder %s30, 0
    %s33 = sadd.s32 %s32, 1
    %s34 = scalar_select %p31, %s32, %s33
    %p37 = pneg %p31
    %p38 = scmp.eq.s32.totalorder %s10, 1
    %p39 = por %p37, %p38
    %p40 = scmp.ne.s32.totalorder %s32, %s35
    %p41 = scmp.eq.s32.totalorder %s10, 0
    %p42 = por %p40, %p41
    %p43 = scmp.ne.s32.totalorder %s32, %s35
    %p44 = scmp.eq.s32.totalorder %s15, 1
    %p45 = por %p43, %p44
    %p46 = scmp.ne.s32.totalorder %s35, %s36
    %p47 = scmp.eq.s32.totalorder %s15, 0
    %p48 = por %p46, %p47
    %p49 = scmp.ne.s32.totalorder %s35, %s36
    %p50 = scmp.eq.s32.totalorder %s16, 1
    %p51 = por %p49, %p50
    %p53 = scmp.ne.s32.totalorder %s36, %s52
    %p54 = scmp.eq.s32.totalorder %s16, 0
    %p55 = por %p53, %p54
    %s56 = ssub.s32 %s18, %s25
    %p57 = scmp.eq.s32.totalorder %s56, 0
    %s59 = sadd.s32 %s58, 1
    %s60 = scalar_select %p57, %s58, %s59
    %p63 = pneg %p57
    %p64 = scmp.eq.s32.totalorder %s10, 1
    %p65 = por %p63, %p64
    %p66 = scmp.ne.s32.totalorder %s58, %s61
    %p67 = scmp.eq.s32.totalorder %s10, 0
    %p68 = por %p66, %p67
    %p69 = scmp.ne.s32.totalorder %s58, %s61
    %p70 = scmp.eq.s32.totalorder %s15, 1
    %p71 = por %p69, %p70
    %p72 = scmp.ne.s32.totalorder %s61, %s62
    %p73 = scmp.eq.s32.totalorder %s15, 0
    %p74 = por %p72, %p73
    %p75 = scmp.ne.s32.totalorder %s61, %s62
    %p76 = scmp.eq.s32.totalorder %s16, 1
    %p77 = por %p75, %p76
    %p79 = scmp.ne.s32.totalorder %s62, %s78
    %p80 = scmp.eq.s32.totalorder %s16, 0
    %p81 = por %p79, %p80
    %s82 = ssub.s32 %s18, %s25
    %p83 = scmp.eq.s32.totalorder %s82, 0
    %s85 = sadd.s32 %s84, 1
    %s86 = scalar_select %p83, %s84, %s85
    %p89 = pneg %p83
    %p90 = scmp.eq.s32.totalorder %s10, 1
    %p91 = por %p89, %p90
    %p92 = scmp.ne.s32.totalorder %s84, %s87
    %p93 = scmp.eq.s32.totalorder %s10, 0
    %p94 = por %p92, %p93
    %p95 = scmp.ne.s32.totalorder %s84, %s87
    %p96 = scmp.eq.s32.totalorder %s15, 1
    %p97 = por %p95, %p96
    %p98 = scmp.ne.s32.totalorder %s87, %s88
    %p99 = scmp.eq.s32.totalorder %s15, 0
    %p100 = por %p98, %p99
    %p101 = scmp.ne.s32.totalorder %s87, %s88
    %p102 = scmp.eq.s32.totalorder %s16, 1
    %p103 = por %p101, %p102
    %p105 = scmp.ne.s32.totalorder %s88, %s104
    %p106 = scmp.eq.s32.totalorder %s16, 0
    %p107 = por %p105, %p106
    %s109 = sadd.s32 %s108, 1
    %p112 = scmp.eq.s32.totalorder %s10, 1
    %p113 = scmp.ne.s32.totalorder %s108, %s110
    %p114 = scmp.eq.s32.totalorder %s10, 0
    %p115 = por %p113, %p114
    %p116 = scmp.ne.s32.totalorder %s108, %s110
    %p117 = scmp.eq.s32.totalorder %s15, 1
    %p118 = por %p116, %p117
    %p119 = scmp.ne.s32.totalorder %s110, %s111
    %p120 = scmp.eq.s32.totalorder %s15, 0
    %p121 = por %p119, %p120
    %p122 = scmp.ne.s32.totalorder %s110, %s111
    %p123 = scmp.eq.s32.totalorder %s16, 1
    %p124 = por %p122, %p123
    %p126 = scmp.ne.s32.totalorder %s111, %s125
    %p127 = scmp.eq.s32.totalorder %s16, 0
    %p128 = por %p126, %p127
    %s129 = ssub.s32 %s17, %s29
    %s130 = ssub.s32 %s18, %s25
    %s131 = sor.u32 %s129, %s130
    %p132 = scmp.eq.s32.totalorder %s131, 0
    %s134 = sadd.s32 %s133, 1
    %s135 = scalar_select %p132, %s133, %s134
    %p138 = pneg %p132
    %p139 = scmp.eq.s32.totalorder %s10, 1
    %p140 = por %p138, %p139
    %p141 = scmp.ne.s32.totalorder %s133, %s136
    %p142 = scmp.eq.s32.totalorder %s10, 0
    %p143 = por %p141, %p142
    %p144 = scmp.ne.s32.totalorder %s133, %s136
    %p145 = scmp.eq.s32.totalorder %s15, 1
    %p146 = por %p144, %p145
    %p147 = scmp.ne.s32.totalorder %s136, %s137
    %p148 = scmp.eq.s32.totalorder %s15, 0
    %p149 = por %p147, %p148
    %p150 = scmp.ne.s32.totalorder %s136, %s137
    %p151 = scmp.eq.s32.totalorder %s16, 1
    %p152 = por %p150, %p151
    %p154 = scmp.ne.s32.totalorder %s137, %s153
    %p155 = scmp.eq.s32.totalorder %s16, 0
    %p156 = por %p154, %p155
    %p157 = scmp.le.s32.totalorder 1, %s10
    %p158 = scmp.lt.s32.totalorder %s10, 3
    %p159 = pnand %p157, %p158
    %p160 = pneg %p159
    // Predicated region
    $region9: #{tpu_custom_call.1} parent=5 // pred_check
      _
    $region10: #{tpu_custom_call.1} parent=5 // pred_check_branch
      %162 = sbr.rel (%p159) target = $region12
    $region11: #{tpu_custom_call.1} parent=5 // pred_region
      %s163 = ssub.s32 %s10, 1
      // Predicated region
      $region13: #{tpu_custom_call.1} parent=11 // pred_check
        %p164 = pneg %p74
      $region14: #{tpu_custom_call.1} parent=11 // pred_check_branch
        %166 = sbr.rel (%p164) target = $region16
      $region15: #{tpu_custom_call.1} parent=11 // pred_region
        %p167 = scmp.lt.s32.totalorder %s20, 0
        %s168 = scalar_select %p167, %s20, 0
        %s169 = smul.addr %s168, 4
        %s170 = scalar_lea.vmem %s1, %s169
      $region16: #{tpu_custom_call.1} parent=11 // pred_fallthru
        _
      // Predicated region
      $region17: #{tpu_custom_call.1} parent=11 // pred_check
        %p171 = pneg %p100
      $region18: #{tpu_custom_call.1} parent=11 // pred_check_branch
        %173 = sbr.rel (%p171) target = $region20
      $region19: #{tpu_custom_call.1} parent=11 // pred_region
        %p174 = scmp.lt.s32.totalorder %s20, 0
        %s175 = scalar_select %p174, %s20, 0
        %s176 = scalar_lea.vmem %s2, %s175
      $region20: #{tpu_custom_call.1} parent=11 // pred_fallthru
        _
      // Predicated region
      $region21: #{tpu_custom_call.1} parent=11 // pred_check
        %p177 = pneg %p121
      $region22: #{tpu_custom_call.1} parent=11 // pred_check_branch
        %179 = sbr.rel (%p177) target = $region24
      $region23: #{tpu_custom_call.1} parent=11 // pred_region
        _
      $region24: #{tpu_custom_call.1} parent=11 // pred_fallthru
        _
    $region12: #{tpu_custom_call.1} parent=5 // pred_fallthru
      _
    %p180 = scmp.lt.s32.totalorder %s10, 2
    // Predicated region
    $region25: #{tpu_custom_call.1} parent=5 // pred_check
      %p181 = pneg %p180
    $region26: #{tpu_custom_call.1} parent=5 // pred_check_branch
      %183 = sbr.rel (%p181) target = $region28
    $region27: #{tpu_custom_call.1} parent=5 // pred_region
      // Predicated region
      $region29: #{tpu_custom_call.1} parent=27 // pred_check
        %p184 = pneg %p42
      $region30: #{tpu_custom_call.1} parent=27 // pred_check_branch
        %186 = sbr.rel (%p184) target = $region32
      $region31: #{tpu_custom_call.1} parent=27 // pred_region
        %p187 = scmp.lt.s32.totalorder %s17, 1
        %s188 = scalar_select %p187, %s17, 1
        %s189 = smul.addr %s188, 32
        %s190 = smul.addr %s189, 4
        %s191 = scalar_lea.vmem %s0, %s190
      $region32: #{tpu_custom_call.1} parent=27 // pred_fallthru
        _
    $region28: #{tpu_custom_call.1} parent=5 // pred_fallthru
      _
    %p192 = scmp.le.s32.totalorder 1, %s10
    %p193 = scmp.lt.s32.totalorder %s10, 3
    %p194 = pnand %p192, %p193
    %p195 = pneg %p194
    // Predicated region
    $region33: #{tpu_custom_call.1} parent=5 // pred_check
      _
    $region34: #{tpu_custom_call.1} parent=5 // pred_check_branch
      %197 = sbr.rel (%p194) target = $region36
    $region35: #{tpu_custom_call.1} parent=5 // pred_region
      %s198 = ssub.s32 %s10, 1
      %p199 = scmp.lt.s32.totalorder %s19, 1
      %s200 = scalar_select %p199, %s19, 1
      %s201 = smul.addr %s200, 32
      %s202 = smul.addr %s201, 4
      %s203 = scalar_lea.vmem %s0, %s202
      %p204 = pneg %p48
      %p205 = pneg %p45
      %p206 = scmp.lt.s32.totalorder %s20, 0
      %s207 = scalar_select %p206, %s20, 0
      %s208 = smul.addr %s207, 4
      %s209 = scalar_lea.vmem %s1, %s208
      %p210 = pneg %p74
      %p211 = pneg %p71
      %p212 = scmp.lt.s32.totalorder %s20, 0
      %s213 = scalar_select %p212, %s20, 0
      %s214 = scalar_lea.vmem %s2, %s213
      %p215 = pneg %p100
      %p216 = pneg %p97
      %p217 = pneg %p121
      %p218 = pneg %p118
      %p219 = pneg %p149
      %p220 = pneg %p146
      %p221 = scmp.lt.s32.totalorder %s19, 1
      %s222 = scalar_select %p221, %s19, 1
      %p223 = scmp.lt.s32.totalorder %s20, 0
      %s224 = scalar_select %p223, %s20, 0
      %s225 = smul.addr %s222, 32
      %s226 = sadd.s32 %s224, %s225
      %s227 = smul.addr %s226, 4
      %s228 = scalar_lea.vmem %s4, %s227
      %p229 = scmp.lt.s32.totalorder %s19, 1
      %s230 = scalar_select %p229, %s19, 1
      %s231 = smul.addr %s230, 32
      %s232 = smul.addr %s231, 4
      %s233 = scalar_lea.vmem %s0, %s232
      %p234 = scmp.lt.s32.totalorder %s20, 0
      %s235 = scalar_select %p234, %s20, 0
      %s236 = smul.addr %s235, 4
      %s237 = scalar_lea.vmem %s1, %s236
      %p238 = scmp.lt.s32.totalorder %s20, 0
      %s239 = scalar_select %p238, %s20, 0
      %s240 = scalar_lea.vmem %s2, %s239
      %p241 = scmp.lt.s32.totalorder %s19, 1
      %s242 = scalar_select %p241, %s19, 1
      %p243 = scmp.lt.s32.totalorder %s20, 0
      %s244 = scalar_select %p243, %s20, 0
      %s245 = smul.addr %s242, 32
      %s246 = sadd.s32 %s244, %s245
      %s247 = smul.addr %s246, 4
      %s248 = scalar_lea.vmem %s4, %s247
      %v250 = vld [vmem:[%s233] sm:$0xf]
      %v251 = vld [vmem:[%s233 + $0x4] sm:$0xf]
      %v252 = vld [vmem:[%s233 + $0x8] sm:$0xf]
      %v253 = vld [vmem:[%s233 + $0xc] sm:$0xf]
      %v254 = vld [vmem:[%s233 + $0x10] sm:$0xf]
      %v255 = vld [vmem:[%s233 + $0x14] sm:$0xf]
      %v256 = vld [vmem:[%s233 + $0x18] sm:$0xf]
      %v257 = vld [vmem:[%s233 + $0x1c] sm:$0xf]
      %v258 = vld [vmem:[%s233 + $0x20] sm:$0xf]
      %v259 = vld [vmem:[%s233 + $0x24] sm:$0xf]
      %v260 = vld [vmem:[%s233 + $0x28] sm:$0xf]
      %v261 = vld [vmem:[%s233 + $0x2c] sm:$0xf]
      %v262 = vld [vmem:[%s233 + $0x30] sm:$0xf]
      %v263 = vld [vmem:[%s233 + $0x34] sm:$0xf]
      %v264 = vld [vmem:[%s233 + $0x38] sm:$0xf]
      %v265 = vld [vmem:[%s233 + $0x3c] sm:$0xf]
      %v266 = vld [vmem:[%s233 + $0x40] sm:$0xf]
      %v267 = vld [vmem:[%s233 + $0x44] sm:$0xf]
      %v268 = vld [vmem:[%s233 + $0x48] sm:$0xf]
      %v269 = vld [vmem:[%s233 + $0x4c] sm:$0xf]
      %v270 = vld [vmem:[%s233 + $0x50] sm:$0xf]
      %v271 = vld [vmem:[%s233 + $0x54] sm:$0xf]
      %v272 = vld [vmem:[%s233 + $0x58] sm:$0xf]
      %v273 = vld [vmem:[%s233 + $0x5c] sm:$0xf]
      %v274 = vld [vmem:[%s233 + $0x60] sm:$0xf]
      %v275 = vld [vmem:[%s233 + $0x64] sm:$0xf]
      %v276 = vld [vmem:[%s233 + $0x68] sm:$0xf]
      %v277 = vld [vmem:[%s233 + $0x6c] sm:$0xf]
      %v278 = vld [vmem:[%s233 + $0x70] sm:$0xf]
      %v279 = vld [vmem:[%s233 + $0x74] sm:$0xf]
      %v280 = vld [vmem:[%s233 + $0x78] sm:$0xf]
      %v281 = vld [vmem:[%s233 + $0x7c] sm:$0xf]
      %v282 = vld [vmem:[%s237] sm:$0xf]
      %v283 = vld [vmem:[%s237 + $0x4] sm:$0xf]
      %v284 = vld [vmem:[%s237 + $0x8] sm:$0xf]
      %v285 = vld [vmem:[%s237 + $0xc] sm:$0xf]
      %v286 = vld [vmem:[%s237 + $0x10] sm:$0xf]
      %v287 = vld [vmem:[%s237 + $0x14] sm:$0xf]
      %v288 = vld [vmem:[%s237 + $0x18] sm:$0xf]
      %v289 = vld [vmem:[%s237 + $0x1c] sm:$0xf]
      %v290 = vld [vmem:[%s240] sm:$0x1]
      %v292 = vlaneseq
      %v293 = vshrl.u32 %v292, 7
      %v294 = vsub.s32 0, %v293
      %v295 = vrot.slane %v290, %v294
      %v329 = vunpack.c.l.b16 %v250
      %v330 = vunpack.c.l.b16 %v251
      %v331 = vunpack.c.l.b16 %v252
      %v332 = vunpack.c.l.b16 %v253
      %v333 = vunpack.c.l.b16 %v254
      %v334 = vunpack.c.l.b16 %v255
      %v335 = vunpack.c.l.b16 %v256
      %v336 = vunpack.c.l.b16 %v257
      %v337 = vunpack.c.l.b16 %v258
      %v338 = vunpack.c.l.b16 %v259
      %v339 = vunpack.c.l.b16 %v260
      %v340 = vunpack.c.l.b16 %v261
      %v341 = vunpack.c.l.b16 %v262
      %v342 = vunpack.c.l.b16 %v263
      %v343 = vunpack.c.l.b16 %v264
      %v344 = vunpack.c.l.b16 %v265
      %v345 = vunpack.c.l.b16 %v266
      %v346 = vunpack.c.l.b16 %v267
      %v347 = vunpack.c.l.b16 %v268
      %v348 = vunpack.c.l.b16 %v269
      %v349 = vunpack.c.l.b16 %v270
      %v350 = vunpack.c.l.b16 %v271
      %v351 = vunpack.c.l.b16 %v272
      %v352 = vunpack.c.l.b16 %v273
      %v353 = vunpack.c.l.b16 %v274
      %v354 = vunpack.c.l.b16 %v275
      %v355 = vunpack.c.l.b16 %v276
      %v356 = vunpack.c.l.b16 %v277
      %v357 = vunpack.c.l.b16 %v278
      %v358 = vunpack.c.l.b16 %v279
      %v359 = vunpack.c.l.b16 %v280
      %v360 = vunpack.c.l.b16 %v281
      %v361 = vpack.c.b16 %v330, %v329
      %v362 = vpack.c.b16 %v332, %v331
      %v363 = vpack.c.b16 %v334, %v333
      %v364 = vpack.c.b16 %v336, %v335
      %v365 = vpack.c.b16 %v338, %v337
      %v366 = vpack.c.b16 %v340, %v339
      %v367 = vpack.c.b16 %v342, %v341
      %v368 = vpack.c.b16 %v344, %v343
      %v369 = vpack.c.b16 %v346, %v345
      %v370 = vpack.c.b16 %v348, %v347
      %v371 = vpack.c.b16 %v350, %v349
      %v372 = vpack.c.b16 %v352, %v351
      %v373 = vpack.c.b16 %v354, %v353
      %v374 = vpack.c.b16 %v356, %v355
      %v375 = vpack.c.b16 %v358, %v357
      %v376 = vpack.c.b16 %v360, %v359
      %v385 = vunpack.c.l.b16 %v282
      %v386 = vunpack.c.l.b16 %v283
      %v387 = vunpack.c.l.b16 %v284
      %v388 = vunpack.c.l.b16 %v285
      %v389 = vunpack.c.l.b16 %v286
      %v390 = vunpack.c.l.b16 %v287
      %v391 = vunpack.c.l.b16 %v288
      %v392 = vunpack.c.l.b16 %v289
      %v393 = vpack.c.b16 %v386, %v385
      %v394 = vpack.c.b16 %v388, %v387
      %v395 = vpack.c.b16 %v390, %v389
      %v396 = vpack.c.b16 %v392, %v391
      %vm401 = vcmask 523264
      %v403 = vsel %vm401, %v361, 0
      %v406 = vsel %vm401, %v362, 0
      %v409 = vsel %vm401, %v363, 0
      %v412 = vsel %vm401, %v364, 0
      %v415 = vsel %vm401, %v365, 0
      %v418 = vsel %vm401, %v366, 0
      %v421 = vsel %vm401, %v367, 0
      %v424 = vsel %vm401, %v368, 0
      %v427 = vsel %vm401, %v369, 0
      %v430 = vsel %vm401, %v370, 0
      %v433 = vsel %vm401, %v371, 0
      %v436 = vsel %vm401, %v372, 0
      %v439 = vsel %vm401, %v373, 0
      %v442 = vsel %vm401, %v374, 0
      %v445 = vsel %vm401, %v375, 0
      %v448 = vsel %vm401, %v376, 0
      %450 = vmatprep.subr.bf16.mxu0 0
      %451 = vmatpush1.bf16.msra.mxu0 %v393
      %452 = vmatprep.subr.bf16.mxu0 0
      %453 = vmatpush1.bf16.msra.mxu0 %v394
      %454 = vmatprep.subr.bf16.mxu0 0
      %455 = vmatpush1.bf16.msra.mxu0 %v395
      %456 = vmatprep.subr.bf16.mxu0 0
      %457 = vmatpush1.bf16.msra.mxu0 %v396
      %458 = vmatprep.subr.bf16.mxu0 0
      %459 = vmatpush1.bf16.msra.mxu0 0
      %460 = vmatprep.subr.bf16.mxu0 0
      %461 = vmatpush1.bf16.msra.mxu0 0
      %462 = vmatprep.subr.bf16.mxu0 0
      %463 = vmatpush1.bf16.msra.mxu0 0
      %464 = vmatprep.subr.bf16.mxu0 0
      %465 = vmatpush1.bf16.msra.mxu0 0
      %466 = vmatprep.subr.bf16.mxu0 0
      %467 = vmatpush1.bf16.msra.mxu0 0
      %468 = vmatprep.subr.bf16.mxu0 0
      %469 = vmatpush1.bf16.msra.mxu0 0
      %470 = vmatprep.subr.bf16.mxu0 0
      %471 = vmatpush1.bf16.msra.mxu0 0
      %472 = vmatprep.subr.bf16.mxu0 0
      %473 = vmatpush1.bf16.msra.mxu0 0
      %474 = vmatprep.subr.bf16.mxu0 0
      %475 = vmatpush1.bf16.msra.mxu0 0
      %476 = vmatprep.subr.bf16.mxu0 0
      %477 = vmatpush1.bf16.msra.mxu0 0
      %478 = vmatprep.subr.bf16.mxu0 0
      %479 = vmatpush1.bf16.msra.mxu0 0
      %480 = vmatprep.subr.bf16.mxu0 0
      %481 = vmatpush1.bf16.msra.mxu0 0
      %482 = vmatprep.mubr.bf16.mxu0 0
      %483 = vmatmul.mubr.bf16.gmra.mrb[0].mxu0 %v403
      %v484 = vpop.f32.mrb[0].mxu0
      %v485 = vadd.f32 %v295, %v484
      %v486 = vpop.f32.mrb[0].mxu0
      %v487 = vpop.f32.mrb[0].mxu0
      %v488 = vadd.f32 %v295, %v487
      %v489 = vpop.f32.mrb[0].mxu0
      %490 = vmatprep.mubr.bf16.mxu0 0
      %491 = vmatmul.mubr.bf16.gmra.mrb[0].mxu0 %v406
      %v492 = vpop.f32.mrb[0].mxu0
      %v493 = vadd.f32 %v295, %v492
      %v494 = vpop.f32.mrb[0].mxu0
      %v495 = vpop.f32.mrb[0].mxu0
      %v496 = vadd.f32 %v295, %v495
      %v497 = vpop.f32.mrb[0].mxu0
      %498 = vmatprep.mubr.bf16.mxu0 0
      %499 = vmatmul.mubr.bf16.gmra.mrb[0].mxu0 %v409
      %v500 = vpop.f32.mrb[0].mxu0
      %v501 = vadd.f32 %v295, %v500
      %v502 = vpop.f32.mrb[0].mxu0
      %v503 = vpop.f32.mrb[0].mxu0
      %v504 = vadd.f32 %v295, %v503
      %v505 = vpop.f32.mrb[0].mxu0
      %506 = vmatprep.mubr.bf16.mxu0 0
      %507 = vmatmul.mubr.bf16.gmra.mrb[0].mxu0 %v412
      %v508 = vpop.f32.mrb[0].mxu0
      %v509 = vadd.f32 %v295, %v508
      %v510 = vpop.f32.mrb[0].mxu0
      %v511 = vpop.f32.mrb[0].mxu0
      %v512 = vadd.f32 %v295, %v511
      %v513 = vpop.f32.mrb[0].mxu0
      %514 = vmatprep.mubr.bf16.mxu0 0
      %515 = vmatmul.mubr.bf16.gmra.mrb[0].mxu0 %v415
      %v516 = vpop.f32.mrb[0].mxu0
      %v517 = vadd.f32 %v295, %v516
      %v518 = vpop.f32.mrb[0].mxu0
      %v519 = vpop.f32.mrb[0].mxu0
      %v520 = vadd.f32 %v295, %v519
      %v521 = vpop.f32.mrb[0].mxu0
      %522 = vmatprep.mubr.bf16.mxu0 0
      %523 = vmatmul.mubr.bf16.gmra.mrb[0].mxu0 %v418
      %v524 = vpop.f32.mrb[0].mxu0
      %v525 = vadd.f32 %v295, %v524
      %v526 = vpop.f32.mrb[0].mxu0
      %v527 = vpop.f32.mrb[0].mxu0
      %v528 = vadd.f32 %v295, %v527
      %v529 = vpop.f32.mrb[0].mxu0
      %530 = vmatprep.mubr.bf16.mxu0 0
      %531 = vmatmul.mubr.bf16.gmra.mrb[0].mxu0 %v421
      %v532 = vpop.f32.mrb[0].mxu0
      %v533 = vadd.f32 %v295, %v532
      %v534 = vpop.f32.mrb[0].mxu0
      %v535 = vpop.f32.mrb[0].mxu0
      %v536 = vadd.f32 %v295, %v535
      %v537 = vpop.f32.mrb[0].mxu0
      %538 = vmatprep.mubr.bf16.mxu0 0
      %539 = vmatmul.mubr.bf16.gmra.mrb[0].mxu0 %v424
      %v540 = vpop.f32.mrb[0].mxu0
      %v541 = vadd.f32 %v295, %v540
      %v542 = vpop.f32.mrb[0].mxu0
      %v543 = vpop.f32.mrb[0].mxu0
      %v544 = vadd.f32 %v295, %v543
      %v545 = vpop.f32.mrb[0].mxu0
      %546 = vmatprep.mubr.bf16.mxu0 0
      %547 = vmatmul.mubr.bf16.gmra.mrb[0].mxu0 %v427
      %v548 = vpop.f32.mrb[0].mxu0
      %v549 = vadd.f32 %v295, %v548
      %v550 = vpop.f32.mrb[0].mxu0
      %v551 = vpop.f32.mrb[0].mxu0
      %v552 = vadd.f32 %v295, %v551
      %v553 = vpop.f32.mrb[0].mxu0
      %554 = vmatprep.mubr.bf16.mxu0 0
      %555 = vmatmul.mubr.bf16.gmra.mrb[0].mxu0 %v430
      %v556 = vpop.f32.mrb[0].mxu0
      %v557 = vadd.f32 %v295, %v556
      %v558 = vpop.f32.mrb[0].mxu0
      %v559 = vpop.f32.mrb[0].mxu0
      %v560 = vadd.f32 %v295, %v559
      %v561 = vpop.f32.mrb[0].mxu0
      %562 = vmatprep.mubr.bf16.mxu0 0
      %563 = vmatmul.mubr.bf16.gmra.mrb[0].mxu0 %v433
      %v564 = vpop.f32.mrb[0].mxu0
      %v565 = vadd.f32 %v295, %v564
      %v566 = vpop.f32.mrb[0].mxu0
      %v567 = vpop.f32.mrb[0].mxu0
      %v568 = vadd.f32 %v295, %v567
      %v569 = vpop.f32.mrb[0].mxu0
      %570 = vmatprep.mubr.bf16.mxu0 0
      %571 = vmatmul.mubr.bf16.gmra.mrb[0].mxu0 %v436
      %v572 = vpop.f32.mrb[0].mxu0
      %v573 = vadd.f32 %v295, %v572
      %v574 = vpop.f32.mrb[0].mxu0
      %v575 = vpop.f32.mrb[0].mxu0
      %v576 = vadd.f32 %v295, %v575
      %v577 = vpop.f32.mrb[0].mxu0
      %578 = vmatprep.mubr.bf16.mxu0 0
      %579 = vmatmul.mubr.bf16.gmra.mrb[0].mxu0 %v439
      %v580 = vpop.f32.mrb[0].mxu0
      %v581 = vadd.f32 %v295, %v580
      %v582 = vpop.f32.mrb[0].mxu0
      %v583 = vpop.f32.mrb[0].mxu0
      %v584 = vadd.f32 %v295, %v583
      %v585 = vpop.f32.mrb[0].mxu0
      %586 = vmatprep.mubr.bf16.mxu0 0
      %587 = vmatmul.mubr.bf16.gmra.mrb[0].mxu0 %v442
      %v588 = vpop.f32.mrb[0].mxu0
      %v589 = vadd.f32 %v295, %v588
      %v590 = vpop.f32.mrb[0].mxu0
      %v591 = vpop.f32.mrb[0].mxu0
      %v592 = vadd.f32 %v295, %v591
      %v593 = vpop.f32.mrb[0].mxu0
      %594 = vmatprep.mubr.bf16.mxu0 0
      %595 = vmatmul.mubr.bf16.gmra.mrb[0].mxu0 %v445
      %v596 = vpop.f32.mrb[0].mxu0
      %v597 = vadd.f32 %v295, %v596
      %v598 = vpop.f32.mrb[0].mxu0
      %v599 = vpop.f32.mrb[0].mxu0
      %v600 = vadd.f32 %v295, %v599
      %v601 = vpop.f32.mrb[0].mxu0
      %602 = vmatprep.mubr.bf16.mxu0 0
      %603 = vmatmul.mubr.bf16.gmra.mrb[0].mxu0 %v448
      %v604 = vpop.f32.mrb[0].mxu0
      %v605 = vadd.f32 %v295, %v604
      %v606 = vpop.f32.mrb[0].mxu0
      %v607 = vpop.f32.mrb[0].mxu0
      %v608 = vadd.f32 %v295, %v607
      %v609 = vpop.f32.mrb[0].mxu0
      %610 = vdwg.mxu0
      %vm611 = vcmp.gt.f32.partialorder %v485, 0.0
      %vm612 = vcmp.gt.f32.partialorder %v488, 0.0
      %vm613 = vcmp.gt.f32.partialorder %v493, 0.0
      %vm614 = vcmp.gt.f32.partialorder %v496, 0.0
      %vm615 = vcmp.gt.f32.partialorder %v501, 0.0
      %vm616 = vcmp.gt.f32.partialorder %v504, 0.0
      %vm617 = vcmp.gt.f32.partialorder %v509, 0.0
      %vm618 = vcmp.gt.f32.partialorder %v512, 0.0
      %vm619 = vcmp.gt.f32.partialorder %v517, 0.0
      %vm620 = vcmp.gt.f32.partialorder %v520, 0.0
      %vm621 = vcmp.gt.f32.partialorder %v525, 0.0
      %vm622 = vcmp.gt.f32.partialorder %v528, 0.0
      %vm623 = vcmp.gt.f32.partialorder %v533, 0.0
      %vm624 = vcmp.gt.f32.partialorder %v536, 0.0
      %vm625 = vcmp.gt.f32.partialorder %v541, 0.0
      %vm626 = vcmp.gt.f32.partialorder %v544, 0.0
      %vm627 = vcmp.gt.f32.partialorder %v549, 0.0
      %vm628 = vcmp.gt.f32.partialorder %v552, 0.0
      %vm629 = vcmp.gt.f32.partialorder %v557, 0.0
      %vm630 = vcmp.gt.f32.partialorder %v560, 0.0
      %vm631 = vcmp.gt.f32.partialorder %v565, 0.0
      %vm632 = vcmp.gt.f32.partialorder %v568, 0.0
      %vm633 = vcmp.gt.f32.partialorder %v573, 0.0
      %vm634 = vcmp.gt.f32.partialorder %v576, 0.0
      %vm635 = vcmp.gt.f32.partialorder %v581, 0.0
      %vm636 = vcmp.gt.f32.partialorder %v584, 0.0
      %vm637 = vcmp.gt.f32.partialorder %v589, 0.0
      %vm638 = vcmp.gt.f32.partialorder %v592, 0.0
      %vm639 = vcmp.gt.f32.partialorder %v597, 0.0
      %vm640 = vcmp.gt.f32.partialorder %v600, 0.0
      %vm641 = vcmp.gt.f32.partialorder %v605, 0.0
      %vm642 = vcmp.gt.f32.partialorder %v608, 0.0
      %v643 = vmul.f32 %v485, 0.2
      %v644 = vmul.f32 %v488, 0.2
      %v645 = vmul.f32 %v493, 0.2
      %v646 = vmul.f32 %v496, 0.2
      %v647 = vmul.f32 %v501, 0.2
      %v648 = vmul.f32 %v504, 0.2
      %v649 = vmul.f32 %v509, 0.2
      %v650 = vmul.f32 %v512, 0.2
      %v651 = vmul.f32 %v517, 0.2
      %v652 = vmul.f32 %v520, 0.2
      %v653 = vmul.f32 %v525, 0.2
      %v654 = vmul.f32 %v528, 0.2
      %v655 = vmul.f32 %v533, 0.2
      %v656 = vmul.f32 %v536, 0.2
      %v657 = vmul.f32 %v541, 0.2
      %v658 = vmul.f32 %v544, 0.2
      %v659 = vmul.f32 %v549, 0.2
      %v660 = vmul.f32 %v552, 0.2
      %v661 = vmul.f32 %v557, 0.2
      %v662 = vmul.f32 %v560, 0.2
      %v663 = vmul.f32 %v565, 0.2
      %v664 = vmul.f32 %v568, 0.2
      %v665 = vmul.f32 %v573, 0.2
      %v666 = vmul.f32 %v576, 0.2
      %v667 = vmul.f32 %v581, 0.2
      %v668 = vmul.f32 %v584, 0.2
      %v669 = vmul.f32 %v589, 0.2
      %v670 = vmul.f32 %v592, 0.2
      %v671 = vmul.f32 %v597, 0.2
      %v672 = vmul.f32 %v600, 0.2
      %v673 = vmul.f32 %v605, 0.2
      %v674 = vmul.f32 %v608, 0.2
      %v675 = vsel %vm611, %v485, %v643
      %v676 = vsel %vm612, %v488, %v644
      %v677 = vsel %vm613, %v493, %v645
      %v678 = vsel %vm614, %v496, %v646
      %v679 = vsel %vm615, %v501, %v647
      %v680 = vsel %vm616, %v504, %v648
      %v681 = vsel %vm617, %v509, %v649
      %v682 = vsel %vm618, %v512, %v650
      %v683 = vsel %vm619, %v517, %v651
      %v684 = vsel %vm620, %v520, %v652
      %v685 = vsel %vm621, %v525, %v653
      %v686 = vsel %vm622, %v528, %v654
      %v687 = vsel %vm623, %v533, %v655
      %v688 = vsel %vm624, %v536, %v656
      %v689 = vsel %vm625, %v541, %v657
      %v690 = vsel %vm626, %v544, %v658
      %v691 = vsel %vm627, %v549, %v659
      %v692 = vsel %vm628, %v552, %v660
      %v693 = vsel %vm629, %v557, %v661
      %v694 = vsel %vm630, %v560, %v662
      %v695 = vsel %vm631, %v565, %v663
      %v696 = vsel %vm632, %v568, %v664
      %v697 = vsel %vm633, %v573, %v665
      %v698 = vsel %vm634, %v576, %v666
      %v699 = vsel %vm635, %v581, %v667
      %v700 = vsel %vm636, %v584, %v668
      %v701 = vsel %vm637, %v589, %v669
      %v702 = vsel %vm638, %v592, %v670
      %v703 = vsel %vm639, %v597, %v671
      %v704 = vsel %vm640, %v600, %v672
      %v705 = vsel %vm641, %v605, %v673
      %v706 = vsel %vm642, %v608, %v674
      %v707 = vpack.c.bf16 %v676, %v675
      %v708 = vpack.c.bf16 %v678, %v677
      %v709 = vpack.c.bf16 %v680, %v679
      %v710 = vpack.c.bf16 %v682, %v681
      %v711 = vpack.c.bf16 %v684, %v683
      %v712 = vpack.c.bf16 %v686, %v685
      %v713 = vpack.c.bf16 %v688, %v687
      %v714 = vpack.c.bf16 %v690, %v689
      %v715 = vpack.c.bf16 %v692, %v691
      %v716 = vpack.c.bf16 %v694, %v693
      %v717 = vpack.c.bf16 %v696, %v695
      %v718 = vpack.c.bf16 %v698, %v697
      %v719 = vpack.c.bf16 %v700, %v699
      %v720 = vpack.c.bf16 %v702, %v701
      %v721 = vpack.c.bf16 %v704, %v703
      %v722 = vpack.c.bf16 %v706, %v705
      %v739 = vunpack.c.l.b16 %v707
      %v740 = vunpack.c.h.b16 %v707
      %v741 = vunpack.c.l.b16 %v708
      %v742 = vunpack.c.h.b16 %v708
      %v743 = vunpack.c.l.b16 %v709
      %v744 = vunpack.c.h.b16 %v709
      %v745 = vunpack.c.l.b16 %v710
      %v746 = vunpack.c.h.b16 %v710
      %v747 = vunpack.c.l.b16 %v711
      %v748 = vunpack.c.h.b16 %v711
      %v749 = vunpack.c.l.b16 %v712
      %v750 = vunpack.c.h.b16 %v712
      %v751 = vunpack.c.l.b16 %v713
      %v752 = vunpack.c.h.b16 %v713
      %v753 = vunpack.c.l.b16 %v714
      %v754 = vunpack.c.h.b16 %v714
      %v755 = vunpack.c.l.b16 %v715
      %v756 = vunpack.c.h.b16 %v715
      %v757 = vunpack.c.l.b16 %v716
      %v758 = vunpack.c.h.b16 %v716
      %v759 = vunpack.c.l.b16 %v717
      %v760 = vunpack.c.h.b16 %v717
      %v761 = vunpack.c.l.b16 %v718
      %v762 = vunpack.c.h.b16 %v718
      %v763 = vunpack.c.l.b16 %v719
      %v764 = vunpack.c.h.b16 %v719
      %v765 = vunpack.c.l.b16 %v720
      %v766 = vunpack.c.h.b16 %v720
      %v767 = vunpack.c.l.b16 %v721
      %v768 = vunpack.c.h.b16 %v721
      %v769 = vunpack.c.l.b16 %v722
      %v770 = vunpack.c.h.b16 %v722
      %v771 = vpack.c.b16 %v739, %v739
      %v772 = vpack.c.b16 %v740, %v740
      %v773 = vpack.c.b16 %v741, %v741
      %v774 = vpack.c.b16 %v742, %v742
      %v775 = vpack.c.b16 %v743, %v743
      %v776 = vpack.c.b16 %v744, %v744
      %v777 = vpack.c.b16 %v745, %v745
      %v778 = vpack.c.b16 %v746, %v746
      %v779 = vpack.c.b16 %v747, %v747
      %v780 = vpack.c.b16 %v748, %v748
      %v781 = vpack.c.b16 %v749, %v749
      %v782 = vpack.c.b16 %v750, %v750
      %v783 = vpack.c.b16 %v751, %v751
      %v784 = vpack.c.b16 %v752, %v752
      %v785 = vpack.c.b16 %v753, %v753
      %v786 = vpack.c.b16 %v754, %v754
      %v787 = vpack.c.b16 %v755, %v755
      %v788 = vpack.c.b16 %v756, %v756
      %v789 = vpack.c.b16 %v757, %v757
      %v790 = vpack.c.b16 %v758, %v758
      %v791 = vpack.c.b16 %v759, %v759
      %v792 = vpack.c.b16 %v760, %v760
      %v793 = vpack.c.b16 %v761, %v761
      %v794 = vpack.c.b16 %v762, %v762
      %v795 = vpack.c.b16 %v763, %v763
      %v796 = vpack.c.b16 %v764, %v764
      %v797 = vpack.c.b16 %v765, %v765
      %v798 = vpack.c.b16 %v766, %v766
      %v799 = vpack.c.b16 %v767, %v767
      %v800 = vpack.c.b16 %v768, %v768
      %v801 = vpack.c.b16 %v769, %v769
      %v802 = vpack.c.b16 %v770, %v770
      %vm835 = vcmask 60416
      %836 = vst.msk [vmem:[%s248] sm:$0xf] %vm835, %v771
      %837 = vst.msk [vmem:[%s248 + $0x4] sm:$0xf] %vm835, %v772
      %838 = vst.msk [vmem:[%s248 + $0x8] sm:$0xf] %vm835, %v773
      %839 = vst.msk [vmem:[%s248 + $0xc] sm:$0xf] %vm835, %v774
      %840 = vst.msk [vmem:[%s248 + $0x10] sm:$0xf] %vm835, %v775
      %841 = vst.msk [vmem:[%s248 + $0x14] sm:$0xf] %vm835, %v776
      %842 = vst.msk [vmem:[%s248 + $0x18] sm:$0xf] %vm835, %v777
      %843 = vst.msk [vmem:[%s248 + $0x1c] sm:$0xf] %vm835, %v778
      %844 = vst.msk [vmem:[%s248 + $0x20] sm:$0xf] %vm835, %v779
      %845 = vst.msk [vmem:[%s248 + $0x24] sm:$0xf] %vm835, %v780
      %846 = vst.msk [vmem:[%s248 + $0x28] sm:$0xf] %vm835, %v781
      %847 = vst.msk [vmem:[%s248 + $0x2c] sm:$0xf] %vm835, %v782
      %848 = vst.msk [vmem:[%s248 + $0x30] sm:$0xf] %vm835, %v783
      %849 = vst.msk [vmem:[%s248 + $0x34] sm:$0xf] %vm835, %v784
      %850 = vst.msk [vmem:[%s248 + $0x38] sm:$0xf] %vm835, %v785
      %851 = vst.msk [vmem:[%s248 + $0x3c] sm:$0xf] %vm835, %v786
      %852 = vst.msk [vmem:[%s248 + $0x40] sm:$0xf] %vm835, %v787
      %853 = vst.msk [vmem:[%s248 + $0x44] sm:$0xf] %vm835, %v788
      %854 = vst.msk [vmem:[%s248 + $0x48] sm:$0xf] %vm835, %v789
      %855 = vst.msk [vmem:[%s248 + $0x4c] sm:$0xf] %vm835, %v790
      %856 = vst.msk [vmem:[%s248 + $0x50] sm:$0xf] %vm835, %v791
      %857 = vst.msk [vmem:[%s248 + $0x54] sm:$0xf] %vm835, %v792
      %858 = vst.msk [vmem:[%s248 + $0x58] sm:$0xf] %vm835, %v793
      %859 = vst.msk [vmem:[%s248 + $0x5c] sm:$0xf] %vm835, %v794
      %860 = vst.msk [vmem:[%s248 + $0x60] sm:$0xf] %vm835, %v795
      %861 = vst.msk [vmem:[%s248 + $0x64] sm:$0xf] %vm835, %v796
      %862 = vst.msk [vmem:[%s248 + $0x68] sm:$0xf] %vm835, %v797
      %863 = vst.msk [vmem:[%s248 + $0x6c] sm:$0xf] %vm835, %v798
      %864 = vst.msk [vmem:[%s248 + $0x70] sm:$0xf] %vm835, %v799
      %865 = vst.msk [vmem:[%s248 + $0x74] sm:$0xf] %vm835, %v800
      %866 = vst.msk [vmem:[%s248 + $0x78] sm:$0xf] %vm835, %v801
      %867 = vst.msk [vmem:[%s248 + $0x7c] sm:$0xf] %vm835, %v802
      %p868 = scmp.lt.s32.totalorder %s19, 1
      %s869 = scalar_select %p868, %s19, 1
      %p870 = scmp.lt.s32.totalorder %s20, 0
      %s871 = scalar_select %p870, %s20, 0
      %s872 = smul.addr %s869, 32
      %s873 = sadd.s32 %s871, %s872
      %s874 = smul.addr %s873, 4
      %s875 = scalar_lea.vmem %s4, %s874
      // Predicated region
      $region37: #{tpu_custom_call.1} parent=35 // pred_check
        %p876 = pneg %p146
      $region38: #{tpu_custom_call.1} parent=35 // pred_check_branch
        %878 = sbr.rel (%p876) target = $region40
      $region39: #{tpu_custom_call.1} parent=35 // pred_region
        _
      $region40: #{tpu_custom_call.1} parent=35 // pred_fallthru
        _
    $region36: #{tpu_custom_call.1} parent=5 // pred_fallthru
      _
    %p879 = scmp.le.s32.totalorder 2, %s10
    // Predicated region
    $region41: #{tpu_custom_call.1} parent=5 // pred_check
      %p880 = pneg %p879
    $region42: #{tpu_custom_call.1} parent=5 // pred_check_branch
      %882 = sbr.rel (%p880) target = $region44
    $region43: #{tpu_custom_call.1} parent=5 // pred_region
      %s883 = ssub.s32 %s10, 2
      // Predicated region
      $region45: #{tpu_custom_call.1} parent=43 // pred_check
        %p884 = pneg %p152
      $region46: #{tpu_custom_call.1} parent=43 // pred_check_branch
        %886 = sbr.rel (%p884) target = $region48
      $region47: #{tpu_custom_call.1} parent=43 // pred_region
        %p887 = scmp.lt.s32.totalorder %s21, 1
        %s888 = scalar_select %p887, %s21, 1
        %p889 = scmp.lt.s32.totalorder %s22, 0
        %s890 = scalar_select %p889, %s22, 0
        %s891 = smul.addr %s888, 32
        %s892 = sadd.s32 %s890, %s891
        %s893 = smul.addr %s892, 4
        %s894 = scalar_lea.vmem %s4, %s893
      $region48: #{tpu_custom_call.1} parent=43 // pred_fallthru
        _
    $region44: #{tpu_custom_call.1} parent=5 // pred_fallthru
      _
  $region6: #{tpu_custom_call.1} parent=0 // loop_footer
    %s14 = sadd.s32 1, %s10
  $region7: #{tpu_custom_call.1} parent=0 // loop_footer_branch
    %9 = sbr.rel target = $region3
  $region8: #{tpu_custom_call.1} parent=0 // loop_exit
    _

</llo_original>
